<compile_context>
chip_gen: v7x
topology: tpu7x:2x2x1
jax: 0.10.0
libtpu: 0.0.40
codegen_flags: <defaults>
</compile_context>

<pallas_src>
import functools

import jax
import jax.numpy as jnp
from jax.experimental import pallas as pl
from jax.experimental.pallas import tpu as pltpu

_LANE = 128
_SUBLANE = 8
_TINY_FALLBACK_BYTES = 256 * 1024     # below this, plain jnp beats pallas_call overhead
_MIN_SPLIT_BYTES = 1 << 20            # only megacore-split single-block work >= 1 MiB


def _round_up(x, m):
    return ((x + m - 1) // m) * m


def _ceil_div(a, b):
    return -(-a // b)


# ----------------------------------------------------------------------------
# Hardware introspection (best effort; conservative defaults = v7x, 1 core)
# ----------------------------------------------------------------------------
def _tpu_vmem_bytes():
    try:
        info = pltpu.get_tpu_info()
        v = getattr(info, "vmem_capacity_bytes", None)
        if v:
            return int(v)
    except Exception:
        pass
    return 64 * 1024 * 1024            # v7x per-TC VMEM (smallest of v5e/v6e/v7x)


def _num_tensorcores():
    try:
        info = pltpu.get_tpu_info()
        for name in ("num_cores", "core_count", "tensorcores_per_chip",
                     "num_tensorcores"):
            v = getattr(info, name, None)
            if v:
                return int(v)
    except Exception:
        pass
    try:
        d = jax.devices()[0]
        for name in ("num_cores", "core_count"):
            v = getattr(d, name, None)
            if v:
                return int(v)
    except Exception:
        pass
    return 1                           # assume single TensorCore (v5e/v6e)


def _vmem_config(vmem_budget_bytes=None):
    phys = _tpu_vmem_bytes()
    # data budget: 3/8 of physical (24 MiB on v7x, 48 MiB on v5e/v6e)
    budget = vmem_budget_bytes if vmem_budget_bytes is not None else (phys * 3) // 8
    # scoped limit: half of physical, capped below physical (32 / 64 MiB)
    limit = min(phys - (4 << 20), max(phys // 2, 32 << 20))
    return phys, max(int(budget), 4096), limit


def _maybe_buffered_spec(block_shape, index_map, n_steps):
    """Streamed-input BlockSpec; deeper pipelining when there are enough steps."""
    if n_steps >= 3 and hasattr(pl, "Buffered"):
        try:
            return pl.BlockSpec(block_shape, index_map,
                                pipeline_mode=pl.Buffered(3))
        except TypeError:
            pass
    return pl.BlockSpec(block_shape, index_map)


# ----------------------------------------------------------------------------
# Kernels
# ----------------------------------------------------------------------------
def _ln_lane_kernel(x_ref, w_ref, b_ref, o_ref, *, eps):
    # x_ref: (TM, C); normalize each row over the lane (C) axis.
    x = x_ref[...].astype(jnp.float32)
    mean = jnp.mean(x, axis=-1, keepdims=True)
    d = x - mean
    var = jnp.mean(d * d, axis=-1, keepdims=True)
    inv = jax.lax.rsqrt(var + eps)
    o_ref[...] = (d * inv * w_ref[...] + b_ref[...]).astype(o_ref.dtype)


def _ln_packed_kernel(x_ref, seg_ref, w_ref, b_ref, o_ref, *, eps):
    # x_ref: (TP, 128) rows, each holding 128//C complete channel groups.
    # seg_ref: (128, 128) f32 block-diagonal averaging matrix
    #          (seg[i, j] = 1/C when i, j in the same group, else 0).
    x = x_ref[...].astype(jnp.float32)
    seg = seg_ref[...]
    # Segmented mean/var via a constant matmul on the otherwise-idle MXU;
    # HIGHEST precision keeps true f32 accumulation.
    mean = jnp.dot(x, seg, preferred_element_type=jnp.float32,
                   precision=jax.lax.Precision.HIGHEST)
    d = x - mean
    var = jnp.dot(d * d, seg, preferred_element_type=jnp.float32,
                  precision=jax.lax.Precision.HIGHEST)
    inv = jax.lax.rsqrt(var + eps)
    o_ref[...] = (d * inv * w_ref[...] + b_ref[...]).astype(o_ref.dtype)


def _ln_sublane_kernel(x_ref, w_ref, b_ref, o_ref, *, eps):
    # x_ref: (TN, C, T_HW) tile of NCHW data, H*W on lanes; reduce over C.
    x = x_ref[...].astype(jnp.float32)
    mean = jnp.mean(x, axis=1, keepdims=True)
    d = x - mean
    var = jnp.mean(d * d, axis=1, keepdims=True)
    inv = jax.lax.rsqrt(var + eps)
    o_ref[...] = (d * inv * w_ref[...] + b_ref[...]).astype(o_ref.dtype)


# ----------------------------------------------------------------------------
# channels_last: small-C packed (lane-dense) path
# ----------------------------------------------------------------------------
def _layernorm_packed_small_c(x2d, w_f32, b_f32, eps, budget, limit, n_cores):
    rows, c = x2d.shape
    itemsize = x2d.dtype.itemsize
    g = _LANE // c
    p = rows // g
    xp = x2d.reshape(p, _LANE)         # free: row-major contiguous

    lane = jnp.arange(_LANE, dtype=jnp.int32)
    same = (lane[:, None] // c) == (lane[None, :] // c)
    seg = same.astype(jnp.float32) * (1.0 / c)          # (128, 128)
    w_t = jnp.tile(w_f32, g).reshape(1, _LANE)
    b_t = jnp.tile(b_f32, g).reshape(1, _LANE)

    bytes_per_row = 5 * _LANE * itemsize                # 3 in + 2 out buffers
    tp = budget // bytes_per_row
    tp = max(_SUBLANE, (tp // _SUBLANE) * _SUBLANE)
    if tp >= p:
        tp = p
        if (n_cores >= 2 and p > 2 * _SUBLANE
                and p * _LANE * itemsize >= _MIN_SPLIT_BYTES):
            tp = _round_up(_ceil_div(p, n_cores), _SUBLANE)
    n_blocks = _ceil_div(p, tp)

    out = pl.pallas_call(
        functools.partial(_ln_packed_kernel, eps=eps),
        out_shape=jax.ShapeDtypeStruct((p, _LANE), x2d.dtype),
        grid_spec=pltpu.PrefetchScalarGridSpec(
            num_scalar_prefetch=0,
            grid=(n_blocks,),
            in_specs=[
                _maybe_buffered_spec((tp, _LANE), lambda i: (i, 0), n_blocks),
                pl.BlockSpec((_LANE, _LANE), lambda i: (0, 0)),
                pl.BlockSpec((1, _LANE), lambda i: (0, 0)),
                pl.BlockSpec((1, _LANE), lambda i: (0, 0)),
            ],
            out_specs=pl.BlockSpec((tp, _LANE), lambda i: (i, 0)),
        ),
        compiler_params=pltpu.CompilerParams(
            dimension_semantics=("parallel",),
            vmem_limit_bytes=limit,
        ),
    )(xp, seg, w_t, b_t)
    return out.reshape(rows, c)


# ----------------------------------------------------------------------------
# channels_last: generic lane-reduction path
# ----------------------------------------------------------------------------
def _layernorm_lane(x2d, w_f32, b_f32, eps, budget, limit, n_cores):
    rows, c = x2d.shape
    itemsize = x2d.dtype.itemsize
    bytes_per_row = 5 * _round_up(c, _LANE) * itemsize  # 3 in + 2 out buffers
    tm = budget // max(1, bytes_per_row)
    tm = max(_SUBLANE, (tm // _SUBLANE) * _SUBLANE)
    if tm >= rows:
        tm = rows                                       # full extent (legal)
        if (n_cores >= 2 and rows > 2 * _SUBLANE
                and rows * c * itemsize >= _MIN_SPLIT_BYTES):
            tm = _round_up(_ceil_div(rows, n_cores), _SUBLANE)
    n_blocks = _ceil_div(rows, tm)

    w2 = w_f32.reshape(1, c)
    b2 = b_f32.reshape(1, c)

    return pl.pallas_call(
        functools.partial(_ln_lane_kernel, eps=eps),
        out_shape=jax.ShapeDtypeStruct((rows, c), x2d.dtype),
        grid_spec=pltpu.PrefetchScalarGridSpec(
            num_scalar_prefetch=0,
            grid=(n_blocks,),
            in_specs=[
                _maybe_buffered_spec((tm, c), lambda i: (i, 0), n_blocks),
                pl.BlockSpec((1, c), lambda i: (0, 0)),
                pl.BlockSpec((1, c), lambda i: (0, 0)),
            ],
            out_specs=pl.BlockSpec((tm, c), lambda i: (i, 0)),
        ),
        compiler_params=pltpu.CompilerParams(
            dimension_semantics=("parallel",),
            vmem_limit_bytes=limit,
        ),
    )(x2d, w2, b2)


def _layernorm_channels_last(x2d, w_f32, b_f32, eps, budget, limit, n_cores):
    rows, c = x2d.shape
    if 0 < c < _LANE and _LANE % c == 0 and rows > 0 and rows % (_LANE // c) == 0:
        return _layernorm_packed_small_c(x2d, w_f32, b_f32, eps,
                                         budget, limit, n_cores)
    return _layernorm_lane(x2d, w_f32, b_f32, eps, budget, limit, n_cores)


# ----------------------------------------------------------------------------
# channels_first: sublane-reduction path (no transposes)
# ----------------------------------------------------------------------------
def _layernorm_channels_first(x, w_f32, b_f32, eps, phys, budget, limit, n_cores):
    n, c, h, w = x.shape
    hw = h * w
    x3 = x.reshape(n, c, hw)
    itemsize = x.dtype.itemsize

    c_pad = _round_up(c, _SUBLANE)
    bytes_per_col = 5 * c_pad * itemsize                # 3 in + 2 out buffers / lane col
    t_hw = budget // max(1, bytes_per_col)
    if t_hw >= hw:
        t_hw = hw                                       # full spatial extent per block
        per_image = bytes_per_col * _round_up(hw, _LANE)
        tn = max(1, min(n, budget // max(1, per_image)))
    else:
        # Each channel row of the block is a separate strided DMA segment:
        # keep it >= 512 lanes (2 KiB f32) for HBM efficiency.
        t_hw = (t_hw // _LANE) * _LANE
        t_hw = max(t_hw, min(512, _round_up(hw, _LANE)), _LANE)
        if t_hw >= hw:
            t_hw = hw
        tn = 1

    nb_n = _ceil_div(n, tn)
    nb_hw = _ceil_div(hw, t_hw)
    # Split a single block only on multi-TensorCore parts with enough work.
    if (n_cores >= 2 and nb_n * nb_hw == 1
            and n * c * hw * itemsize >= _MIN_SPLIT_BYTES):
        if n >= 2:
            tn = _ceil_div(n, n_cores)
            nb_n = _ceil_div(n, tn)
        elif hw >= 4 * _LANE:
            t_hw = _round_up(_ceil_div(hw, n_cores), _LANE)
            nb_hw = _ceil_div(hw, t_hw)

    # The lane floor / huge C can push the minimum viable block past the data
    # budget — make sure the scoped VMEM limit still covers it.
    block_bytes = 5 * tn * c_pad * _round_up(t_hw, _LANE) * itemsize
    limit = min(phys - (2 << 20), max(limit, block_bytes + (4 << 20)))

    w3 = w_f32.reshape(1, c, 1)
    b3 = b_f32.reshape(1, c, 1)
    n_steps = nb_n * nb_hw

    out = pl.pallas_call(
        functools.partial(_ln_sublane_kernel, eps=eps),
        out_shape=jax.ShapeDtypeStruct((n, c, hw), x.dtype),
        grid_spec=pltpu.PrefetchScalarGridSpec(
            num_scalar_prefetch=0,
            grid=(nb_n, nb_hw),
            in_specs=[
                _maybe_buffered_spec((tn, c, t_hw), lambda i, j: (i, 0, j), n_steps),
                pl.BlockSpec((1, c, 1), lambda i, j: (0, 0, 0)),
                pl.BlockSpec((1, c, 1), lambda i, j: (0, 0, 0)),
            ],
            out_specs=pl.BlockSpec((tn, c, t_hw), lambda i, j: (i, 0, j)),
        ),
        compiler_params=pltpu.CompilerParams(
            dimension_semantics=("parallel", "parallel"),
            vmem_limit_bytes=limit,
        ),
    )(x3, w3, b3)
    return out.reshape(n, c, h, w)


# ----------------------------------------------------------------------------
# Tiny-tensor fallback (pallas_call setup cost >> HBM time for SEA-RAFT shapes)
# ----------------------------------------------------------------------------
def _layernorm_jnp(x, w_f32, b_f32, eps, data_format):
    xf = x.astype(jnp.float32)
    if data_format == "channels_last":
        mean = jnp.mean(xf, axis=-1, keepdims=True)
        var = jnp.mean((xf - mean) ** 2, axis=-1, keepdims=True)
        out = (xf - mean) * jax.lax.rsqrt(var + eps) * w_f32 + b_f32
    else:
        mean = jnp.mean(xf, axis=1, keepdims=True)
        var = jnp.mean((xf - mean) ** 2, axis=1, keepdims=True)
        xn = (xf - mean) * jax.lax.rsqrt(var + eps)
        out = w_f32[None, :, None, None] * xn + b_f32[None, :, None, None]
    return out.astype(x.dtype)


# ----------------------------------------------------------------------------
# Public entry point (matches the PyTorch LayerNorm forward)
# ----------------------------------------------------------------------------
def layer_norm(x, weight, bias, eps=1e-6, data_format="channels_last",
               *, min_pallas_bytes=_TINY_FALLBACK_BYTES, vmem_budget_bytes=None):
    """channels_last : normalize over the last dim of x (any rank).
    channels_first: x is NCHW, normalize over dim 1."""
    if data_format not in ("channels_last", "channels_first"):
        raise NotImplementedError

    w_f32 = weight.astype(jnp.float32)
    b_f32 = bias.astype(jnp.float32)

    if x.size * x.dtype.itemsize < min_pallas_bytes:
        return _layernorm_jnp(x, w_f32, b_f32, eps, data_format)

    phys, budget, limit = _vmem_config(vmem_budget_bytes)
    n_cores = _num_tensorcores()

    if data_format == "channels_last":
        c = x.shape[-1]
        lead = x.shape[:-1]
        out = _layernorm_channels_last(x.reshape(-1, c), w_f32, b_f32, eps,
                                       budget, limit, n_cores)
        return out.reshape(*lead, c)
    else:
        return _layernorm_channels_first(x, w_f32, b_f32, eps,
                                         phys, budget, limit, n_cores)


# ----------------------------------------------------------------------------
# Reference + tests
# ----------------------------------------------------------------------------
def _reference(x, weight, bias, eps, data_format):
    xf = x.astype(jnp.float32)
    if data_format == "channels_last":
        mean = jnp.mean(xf, axis=-1, keepdims=True)
        var = jnp.mean((xf - mean) ** 2, axis=-1, keepdims=True)
        out = (xf - mean) / jnp.sqrt(var + eps) * weight + bias
    else:
        mean = jnp.mean(xf, axis=1, keepdims=True)
        var = jnp.mean((xf - mean) ** 2, axis=1, keepdims=True)
        xn = (xf - mean) / jnp.sqrt(var + eps)
        out = weight[None, :, None, None] * xn + bias[None, :, None, None]
    return out.astype(x.dtype)


if __name__ == "__main__":
    key = jax.random.PRNGKey(0)
    k1, k2, k3, k4, k5, k6 = jax.random.split(key, 6)
    eps = 1e-6

    def check(x, weight, bias, data_format, **kw):
        out = jax.block_until_ready(
            layer_norm(x, weight, bias, eps=eps, data_format=data_format, **kw))
        ref = _reference(x, weight, bias, eps, data_format)
        assert out.shape == x.shape and out.dtype == x.dtype
        assert jnp.allclose(out, ref, atol=1e-5, rtol=1e-5), (data_format, x.shape, kw)

    C = 4
    weight = 0.5 + jax.random.uniform(k5, (C,), dtype=jnp.float32)
    bias = jax.random.normal(k4, (C,), dtype=jnp.float32)

    # SEA-RAFT channels_first NCHW — default path (tiny => jnp fallback)
    x_cf = jax.random.normal(k1, (2, C, 16, 16), dtype=jnp.float32)
    check(x_cf, weight, bias, "channels_first")
    # Same tensor, forced through the Pallas sublane kernel (tiny VMEM budget =>
    # multi-step grid).
    check(x_cf, weight, bias, "channels_first",
          min_pallas_bytes=0, vmem_budget_bytes=32 * 1024)

    # channels_first with spatial tiling + ragged lane block (hw not % 128)
    x_cf_rag = jax.random.normal(k2, (1, C, 33, 33), dtype=jnp.float32)
    check(x_cf_rag, weight, bias, "channels_first",
          min_pallas_bytes=0, vmem_budget_bytes=32 * 1024)
    x_cf_full = jax.random.normal(k3, (1, C, 17, 19), dtype=jnp.float32)
    check(x_cf_full, weight, bias, "channels_first",
          min_pallas_bytes=0, vmem_budget_bytes=32 * 1024)

    # channels_last small-C packed lane-dense path (rows % (128/C) == 0)
    x_cl = jax.random.normal(k2, (4, 16, 16, C), dtype=jnp.float32)
    check(x_cl, weight, bias, "channels_last",
          min_pallas_bytes=0, vmem_budget_bytes=32 * 1024)

    # channels_last ragged rows (rows not % (128/C)) -> generic lane kernel
    x_rag = jax.random.normal(k3, (3, 10, 10, C), dtype=jnp.float32)
    check(x_rag, weight, bias, "channels_last",
          min_pallas_bytes=0, vmem_budget_bytes=32 * 1024)

    # channels_last with C >= 128 (already lane-dense generic path)
    C2 = 256
    weight2 = 0.5 + jax.random.uniform(k6, (C2,), dtype=jnp.float32)
    bias2 = jax.random.normal(k6, (C2,), dtype=jnp.float32)
    x_big_c = jax.random.normal(k1, (4, 8, C2), dtype=jnp.float32)
    check(x_big_c, weight2, bias2, "channels_last",
          min_pallas_bytes=0, vmem_budget_bytes=32 * 1024)

    # Default budgets / limits (derived from get_tpu_info) on moderate tensors.
    C3 = 16
    weight3 = 0.5 + jax.random.uniform(k5, (C3,), dtype=jnp.float32)
    bias3 = jax.random.normal(k4, (C3,), dtype=jnp.float32)
    x_def_cl = jax.random.normal(k2, (2, 64, 64, C3), dtype=jnp.float32)
    check(x_def_cl, weight3, bias3, "channels_last")
    C4 = 64
    weight4 = 0.5 + jax.random.uniform(k6, (C4,), dtype=jnp.float32)
    bias4 = jax.random.normal(k6, (C4,), dtype=jnp.float32)
    x_def_cf = jax.random.normal(k3, (2, C4, 64, 64), dtype=jnp.float32)
    check(x_def_cf, weight4, bias4, "channels_first")

    print("KERNEL_OK")
</pallas_src>

<mosaic_0001>
module attributes {stable_mosaic.version = 11 : i64} {
  func.func @_ln_sublane_kernel(%arg0: i32, %arg1: i32, %arg2: memref<1x4x256xf32, #tpu.memory_space<vmem>>, %arg3: memref<1x4x1xf32, #tpu.memory_space<vmem>>, %arg4: memref<1x4x1xf32, #tpu.memory_space<vmem>>, %arg5: memref<1x4x256xf32, #tpu.memory_space<vmem>>) attributes {dimension_semantics = [#tpu.dimension_semantics<parallel>, #tpu.dimension_semantics<parallel>], iteration_bounds = array<i64: 2, 1>, scalar_prefetch = 0 : i64, scratch_operands = 0 : i64, tpu.core_type = #tpu.core_type<tc>, window_params = [{transform_indices = @transform_0, window_bounds = array<i64: 1, 4, 256>}, {pipeline_mode = #tpu.pipeline_mode<synchronous>, transform_indices = @transform_1, window_bounds = array<i64: 1, 4, 1>}, {pipeline_mode = #tpu.pipeline_mode<synchronous>, transform_indices = @transform_2, window_bounds = array<i64: 1, 4, 1>}, {transform_indices = @transform_3, window_bounds = array<i64: 1, 4, 256>}]} {
    %c0 = arith.constant 0 : index
    %c0_0 = arith.constant 0 : index
    %c0_1 = arith.constant 0 : index
    %0 = vector.load %arg2[%c0, %c0_0, %c0_1] : memref<1x4x256xf32, #tpu.memory_space<vmem>>, vector<1x4x256xf32>
    %cst = arith.constant dense<0.000000e+00> : vector<1x256xf32>
    %1 = vector.multi_reduction <add>, %0, %cst [1] : vector<1x4x256xf32> to vector<1x256xf32>
    %2 = vector.shape_cast %1 : vector<1x256xf32> to vector<1x1x256xf32>
    %cst_2 = arith.constant 4.000000e+00 : f32
    %3 = vector.broadcast %cst_2 : f32 to vector<1x1x256xf32>
    %4 = arith.divf %2, %3 : vector<1x1x256xf32>
    %5 = vector.broadcast %4 : vector<1x1x256xf32> to vector<1x4x256xf32>
    %6 = arith.subf %0, %5 : vector<1x4x256xf32>
    %7 = arith.mulf %6, %6 : vector<1x4x256xf32>
    %cst_3 = arith.constant dense<0.000000e+00> : vector<1x256xf32>
    %8 = vector.multi_reduction <add>, %7, %cst_3 [1] : vector<1x4x256xf32> to vector<1x256xf32>
    %9 = vector.shape_cast %8 : vector<1x256xf32> to vector<1x1x256xf32>
    %cst_4 = arith.constant 4.000000e+00 : f32
    %10 = vector.broadcast %cst_4 : f32 to vector<1x1x256xf32>
    %11 = arith.divf %9, %10 : vector<1x1x256xf32>
    %cst_5 = arith.constant 9.99999997E-7 : f32
    %12 = vector.broadcast %cst_5 : f32 to vector<1x1x256xf32>
    %13 = arith.addf %11, %12 : vector<1x1x256xf32>
    %14 = math.rsqrt %13 : vector<1x1x256xf32>
    %15 = vector.broadcast %14 : vector<1x1x256xf32> to vector<1x4x256xf32>
    %16 = arith.mulf %6, %15 : vector<1x4x256xf32>
    %c0_6 = arith.constant 0 : index
    %c0_7 = arith.constant 0 : index
    %c0_8 = arith.constant 0 : index
    %17 = vector.load %arg3[%c0_6, %c0_7, %c0_8] : memref<1x4x1xf32, #tpu.memory_space<vmem>>, vector<1x4x1xf32>
    %18 = vector.broadcast %17 : vector<1x4x1xf32> to vector<1x4x256xf32>
    %19 = arith.mulf %16, %18 : vector<1x4x256xf32>
    %c0_9 = arith.constant 0 : index
    %c0_10 = arith.constant 0 : index
    %c0_11 = arith.constant 0 : index
    %20 = vector.load %arg4[%c0_9, %c0_10, %c0_11] : memref<1x4x1xf32, #tpu.memory_space<vmem>>, vector<1x4x1xf32>
    %21 = vector.broadcast %20 : vector<1x4x1xf32> to vector<1x4x256xf32>
    %22 = arith.addf %19, %21 : vector<1x4x256xf32>
    %c0_12 = arith.constant 0 : index
    %c0_13 = arith.constant 0 : index
    %c0_14 = arith.constant 0 : index
    %23 = vector.load %arg5[%c0_12, %c0_13, %c0_14] : memref<1x4x256xf32, #tpu.memory_space<vmem>>, vector<1x4x256xf32>
    tpu.vector_store %arg5[%c0_12, %c0_13, %c0_14], %22 {strides = array<i32>} : memref<1x4x256xf32, #tpu.memory_space<vmem>>, vector<1x4x256xf32>,
    return
  }
  func.func @transform_0(%arg0: i32, %arg1: i32) -> (i32, i32, i32) {
    %c0_i32 = arith.constant 0 : i32
    %c0_i32_0 = arith.constant 0 : i32
    return %arg0, %c0_i32, %arg1 : i32, i32, i32
  }
  func.func @transform_1(%arg0: i32, %arg1: i32) -> (i32, i32, i32) {
    %c0_i32 = arith.constant 0 : i32
    %c0_i32_0 = arith.constant 0 : i32
    %c0_i32_1 = arith.constant 0 : i32
    %c0_i32_2 = arith.constant 0 : i32
    return %c0_i32, %c0_i32_0, %c0_i32_1 : i32, i32, i32
  }
  func.func @transform_2(%arg0: i32, %arg1: i32) -> (i32, i32, i32) {
    %c0_i32 = arith.constant 0 : i32
    %c0_i32_0 = arith.constant 0 : i32
    %c0_i32_1 = arith.constant 0 : i32
    %c0_i32_2 = arith.constant 0 : i32
    return %c0_i32, %c0_i32_0, %c0_i32_1 : i32, i32, i32
  }
  func.func @transform_3(%arg0: i32, %arg1: i32) -> (i32, i32, i32) {
    %c0_i32 = arith.constant 0 : i32
    %c0_i32_0 = arith.constant 0 : i32
    return %arg0, %c0_i32, %arg1 : i32, i32, i32
  }
}

</mosaic_0001>

<llo_original>
// kernel: tpu_custom_call.1
$region0: #{tpu_custom_call.1}
  #allocation0 [shape = 'u32[]', space=smem, size = 0x4, offset = 0x4, fixed_abs, tag = 'smem constant byte address 0x4 - core index']
  #allocation1 [shape = 'u32[144,128]{1,0:T(1,128)}', space=vmem, size = 0x12000, scoped, tag = 'internal scratch']
  %s0 = inlined_call_operand.hbm [shape: f32[2,4,256], index: 0, kind: input, shape index: {}]
  %s1 = inlined_call_operand.vmem [shape: f32[1,4,1], index: 1, kind: input, shape index: {}]
  %s2 = inlined_call_operand.vmem [shape: f32[1,4,1], index: 2, kind: input, shape index: {}]
  %s3 = inlined_call_operand.hbm [shape: f32[2,4,256], index: 3, kind: output, shape index: {}]
  %s4 = sld [smem:[#allocation0]]
  $region49: #{tpu_custom_call.1} parent=0
    _
  %s6 = ssub.s32 1, %s4
  %s7 = scalar_select 0, %s6, %s4
  $region1: #{tpu_custom_call.1} parent=0
    #allocation2 [shape = 'u8[8192]{0}', space=vmem, size = 0x2000, scoped, tag = 'input window, operand 0']
    #allocation3 [shape = 's32[2]{0}', space=sflag, size = 0x8, scoped, tag = 'scoped memory for tpu_custom_call.1']
    #allocation4 [shape = 's32[2]{0}', space=sflag, size = 0x8, scoped, tag = 'scoped memory for tpu_custom_call.1']
    #allocation5 [shape = 'u8[8192]{0}', space=vmem, size = 0x2000, scoped, tag = 'output window, operand 0']
    %8 = vsyncpa [#allocation3], 0
    %s9 = scalar_lea.sflag [#allocation3], 1
    %10 = vsyncpa %s9, 0
    %11 = vsyncpa [#allocation4], 0
    %s12 = scalar_lea.sflag [#allocation4], 1
    %13 = vsyncpa %s12, 0
    loop: start=0, step=1, limit=4
    $region2: #{tpu_custom_call.1} parent=1 // loop_pre_header
      _
    $region3: #{tpu_custom_call.1} parent=1 // loop_header
      %s15 = sphi 0, %s19
      %p16 = scmp.ge.s32.totalorder %s15, 4
      %s22 = sphi 0, %s34
      %s23 = sphi 0, %s30
      %s24 = sphi 0, %s22
      %s25 = sphi 0, %s23
      %s26 = sphi 0, %s24
      %s27 = sphi 0, %s25
      %s39 = sphi 0, %s41
      %s42 = sphi 0, %s39
      %s43 = sphi 0, %s42
      %s59 = sphi 0, %s43
      %s63 = sphi 0, %s63
      %s65 = sphi 0, %s63
      %s66 = sphi 0, %s65
      %s80 = sphi 0, %s66
      %s84 = sphi 0, %s84
      %s86 = sphi 0, %s84
      %s87 = sphi 0, %s86
      %s101 = sphi 0, %s87
      %s109 = sphi 0, %s111
      %s112 = sphi 0, %s109
      %s113 = sphi 0, %s112
      %s129 = sphi 0, %s113
    $region4: #{tpu_custom_call.1} parent=1 // loop_header_branch
      %18 = sbr.rel (%p16) target = $region8
    $region5: #{tpu_custom_call.1} parent=1 // loop_body
      %s20 = ssub.s32 %s15, 1
      %s21 = ssub.s32 %s15, 2
      %s28 = sadd.s32 1, %s23
      %p29 = scmp.ge.s32.totalorder %s28, 1
      %s30 = scalar_select %p29, 0, %s28
      %s31 = sadd.s32 1, %s22
      %s32 = scalar_select %p29, %s31, %s22
      %p33 = scmp.ge.s32.totalorder %s32, 2
      %s34 = scalar_select %p33, 0, %s32
      %s35 = ssub.s32 %s22, %s34
      %s36 = ssub.s32 %s23, %s30
      %s37 = sor.u32 %s35, %s36
      %p38 = scmp.eq.s32.totalorder %s37, 0
      %s40 = sadd.s32 %s39, 1
      %s41 = scalar_select %p38, %s39, %s40
      %p44 = pneg %p38
      %p45 = scmp.eq.s32.totalorder %s15, 1
      %p46 = por %p44, %p45
      %p47 = scmp.ne.s32.totalorder %s39, %s42
      %p48 = scmp.eq.s32.totalorder %s15, 0
      %p49 = por %p47, %p48
      %p50 = scmp.ne.s32.totalorder %s39, %s42
      %p51 = scmp.eq.s32.totalorder %s20, 1
      %p52 = por %p50, %p51
      %p53 = scmp.ne.s32.totalorder %s42, %s43
      %p54 = scmp.eq.s32.totalorder %s20, 0
      %p55 = por %p53, %p54
      %p56 = scmp.ne.s32.totalorder %s42, %s43
      %p57 = scmp.eq.s32.totalorder %s21, 1
      %p58 = por %p56, %p57
      %p60 = scmp.ne.s32.totalorder %s43, %s59
      %p61 = scmp.eq.s32.totalorder %s21, 0
      %p62 = por %p60, %p61
      %s64 = sadd.s32 %s63, 1
      %p67 = scmp.eq.s32.totalorder %s15, 1
      %p68 = scmp.ne.s32.totalorder %s63, %s65
      %p69 = scmp.eq.s32.totalorder %s15, 0
      %p70 = por %p68, %p69
      %p71 = scmp.ne.s32.totalorder %s63, %s65
      %p72 = scmp.eq.s32.totalorder %s20, 1
      %p73 = por %p71, %p72
      %p74 = scmp.ne.s32.totalorder %s65, %s66
      %p75 = scmp.eq.s32.totalorder %s20, 0
      %p76 = por %p74, %p75
      %p77 = scmp.ne.s32.totalorder %s65, %s66
      %p78 = scmp.eq.s32.totalorder %s21, 1
      %p79 = por %p77, %p78
      %p81 = scmp.ne.s32.totalorder %s66, %s80
      %p82 = scmp.eq.s32.totalorder %s21, 0
      %p83 = por %p81, %p82
      %s85 = sadd.s32 %s84, 1
      %p88 = scmp.eq.s32.totalorder %s15, 1
      %p89 = scmp.ne.s32.totalorder %s84, %s86
      %p90 = scmp.eq.s32.totalorder %s15, 0
      %p91 = por %p89, %p90
      %p92 = scmp.ne.s32.totalorder %s84, %s86
      %p93 = scmp.eq.s32.totalorder %s20, 1
      %p94 = por %p92, %p93
      %p95 = scmp.ne.s32.totalorder %s86, %s87
      %p96 = scmp.eq.s32.totalorder %s20, 0
      %p97 = por %p95, %p96
      %p98 = scmp.ne.s32.totalorder %s86, %s87
      %p99 = scmp.eq.s32.totalorder %s21, 1
      %p100 = por %p98, %p99
      %p102 = scmp.ne.s32.totalorder %s87, %s101
      %p103 = scmp.eq.s32.totalorder %s21, 0
      %p104 = por %p102, %p103
      %s105 = ssub.s32 %s22, %s34
      %s106 = ssub.s32 %s23, %s30
      %s107 = sor.u32 %s105, %s106
      %p108 = scmp.eq.s32.totalorder %s107, 0
      %s110 = sadd.s32 %s109, 1
      %s111 = scalar_select %p108, %s109, %s110
      %p114 = pneg %p108
      %p115 = scmp.eq.s32.totalorder %s15, 1
      %p116 = por %p114, %p115
      %p117 = scmp.ne.s32.totalorder %s109, %s112
      %p118 = scmp.eq.s32.totalorder %s15, 0
      %p119 = por %p117, %p118
      %p120 = scmp.ne.s32.totalorder %s109, %s112
      %p121 = scmp.eq.s32.totalorder %s20, 1
      %p122 = por %p120, %p121
      %p123 = scmp.ne.s32.totalorder %s112, %s113
      %p124 = scmp.eq.s32.totalorder %s20, 0
      %p125 = por %p123, %p124
      %p126 = scmp.ne.s32.totalorder %s112, %s113
      %p127 = scmp.eq.s32.totalorder %s21, 1
      %p128 = por %p126, %p127
      %p130 = scmp.ne.s32.totalorder %s113, %s129
      %p131 = scmp.eq.s32.totalorder %s21, 0
      %p132 = por %p130, %p131
      %p133 = scmp.le.s32.totalorder 1, %s15
      %p134 = scmp.lt.s32.totalorder %s15, 3
      %p135 = pnand %p133, %p134
      %p136 = pneg %p135
      // Predicated region
      $region9: #{tpu_custom_call.1} parent=5 // pred_check
        _
      $region10: #{tpu_custom_call.1} parent=5 // pred_check_branch
        %138 = sbr.rel (%p135) target = $region12
      $region11: #{tpu_custom_call.1} parent=5 // pred_region
        %s139 = ssub.s32 %s15, 1
        // Predicated region
        $region13: #{tpu_custom_call.1} parent=11 // pred_check
          %p140 = pneg %p76
        $region14: #{tpu_custom_call.1} parent=11 // pred_check_branch
          %142 = sbr.rel (%p140) target = $region16
        $region15: #{tpu_custom_call.1} parent=11 // pred_region
          _
        $region16: #{tpu_custom_call.1} parent=11 // pred_fallthru
          _
        // Predicated region
        $region17: #{tpu_custom_call.1} parent=11 // pred_check
          %p143 = pneg %p97
        $region18: #{tpu_custom_call.1} parent=11 // pred_check_branch
          %145 = sbr.rel (%p143) target = $region20
        $region19: #{tpu_custom_call.1} parent=11 // pred_region
          _
        $region20: #{tpu_custom_call.1} parent=11 // pred_fallthru
          _
      $region12: #{tpu_custom_call.1} parent=5 // pred_fallthru
        _
      %p146 = scmp.lt.s32.totalorder %s15, 2
      // Predicated region
      $region21: #{tpu_custom_call.1} parent=5 // pred_check
        %p147 = pneg %p146
      $region22: #{tpu_custom_call.1} parent=5 // pred_check_branch
        %149 = sbr.rel (%p147) target = $region24
      $region23: #{tpu_custom_call.1} parent=5 // pred_region
        // Predicated region
        $region25: #{tpu_custom_call.1} parent=23 // pred_check
          %p150 = pneg %p49
        $region26: #{tpu_custom_call.1} parent=23 // pred_check_branch
          %152 = sbr.rel (%p150) target = $region28
        $region27: #{tpu_custom_call.1} parent=23 // pred_region
          %s153 = sand.u32 %s39, 1
          %s154 = scalar_lea.sflag [#allocation3], %s153
          %s155 = sand.u32 %s39, 1
          %s156 = smul.addr %s155, 8
          %s157 = scalar_lea.vmem [#allocation2], %s156
          %s158 = smul.u32 2, %s23
          %s160 = ssub.s32 128, 128
          %161 = vsyncadd %s154, %s160
          %s162 = smul.addr %s22, 2
          %s163 = sadd.s32 %s158, %s162
          %s164 = smul.addr %s163, 64
          %s165 = scalar_lea.hbm %s0, %s164
          %s167 = sshll.u32 %s157, 4
          %s168 = int_to_ptr.vmem [resolvable:$true] %s167
          %170 = dma.hbm_to_vmem [thread:$0]  %s165, 128, %s168, %s154
        $region28: #{tpu_custom_call.1} parent=23 // pred_fallthru
          _
      $region24: #{tpu_custom_call.1} parent=5 // pred_fallthru
        _
      %p171 = scmp.le.s32.totalorder 1, %s15
      %p172 = scmp.lt.s32.totalorder %s15, 3
      %p173 = pnand %p171, %p172
      %p174 = pneg %p173
      // Predicated region
      $region29: #{tpu_custom_call.1} parent=5 // pred_check
        _
      $region30: #{tpu_custom_call.1} parent=5 // pred_check_branch
        %176 = sbr.rel (%p173) target = $region32
      $region31: #{tpu_custom_call.1} parent=5 // pred_region
        %s177 = ssub.s32 %s15, 1
        %s178 = sand.u32 %s42, 1
        %s179 = scalar_lea.sflag [#allocation3], %s178
        %s180 = sand.u32 %s42, 1
        %s181 = smul.addr %s180, 8
        %s182 = scalar_lea.vmem [#allocation2], %s181
        // Predicated region
        $region33: #{tpu_custom_call.1} parent=31 // pred_check
          %p183 = pneg %p55
        $region34: #{tpu_custom_call.1} parent=31 // pred_check_branch
          %185 = sbr.rel (%p183) target = $region36
        $region35: #{tpu_custom_call.1} parent=31 // pred_region
          %186 = dma.done %s179, 128
        $region36: #{tpu_custom_call.1} parent=31 // pred_fallthru
          _
        %s187 = sand.u32 %s42, 1
        %s188 = scalar_lea.sflag [#allocation3], %s187
        %s189 = sand.u32 %s42, 1
        %s190 = smul.addr %s189, 8
        %s191 = scalar_lea.vmem [#allocation2], %s190
        %p192 = pneg %p55
        %p193 = pneg %p52
        %p194 = pneg %p76
        %p195 = pneg %p73
        %p196 = pneg %p97
        %p197 = pneg %p94
        %p198 = pneg %p125
        %p199 = pneg %p122
        %s200 = sand.u32 %s112, 1
        %s201 = scalar_lea.sflag [#allocation4], %s200
        %s202 = sand.u32 %s112, 1
        %s203 = smul.addr %s202, 8
        %s204 = scalar_lea.vmem [#allocation5], %s203
        %s205 = smul.u32 2, %s25
        %s206 = smul.u32 2, %s25
        %v207 = vld [vmem:[%s182] sm:$0xff]
        %v209 = vcombine.high %v207, %v207
        %vm211 = vcmask 1043456
        %v212 = vsel %vm211, %v207, 0.0
        %v213 = vrot.slane %v212, 4
        %v214 = vadd.f32 %v212, %v213
        %v215 = vrot.slane %v214, 2
        %v216 = vadd.f32 %v214, %v215
        %v217 = vrot.slane %v216, 1
        %v218 = vadd.f32 %v216, %v217
        %v219 = vsel %vm211, %v209, 0.0
        %v220 = vrot.slane %v219, 4
        %v221 = vadd.f32 %v219, %v220
        %v222 = vrot.slane %v221, 2
        %v223 = vadd.f32 %v221, %v222
        %v224 = vrot.slane %v223, 1
        %v225 = vadd.f32 %v223, %v224
        %v226 = vrcp.pop 4.0
        %v227 = vmul.f32 %v218, %v226
        %v228 = vmul.f32 %v225, %v226
        %v231 = vcombine.low %v227, %v228
        %v233 = vsub.f32 %v207, %v231
        %v234 = vmul.f32 %v233, %v233
        %v236 = vcombine.high %v234, %v234
        %v238 = vsel %vm211, %v234, 0.0
        %v239 = vrot.slane %v238, 4
        %v240 = vadd.f32 %v238, %v239
        %v241 = vrot.slane %v240, 2
        %v242 = vadd.f32 %v240, %v241
        %v243 = vrot.slane %v242, 1
        %v244 = vadd.f32 %v242, %v243
        %v245 = vsel %vm211, %v236, 0.0
        %v246 = vrot.slane %v245, 4
        %v247 = vadd.f32 %v245, %v246
        %v248 = vrot.slane %v247, 2
        %v249 = vadd.f32 %v247, %v248
        %v250 = vrot.slane %v249, 1
        %v251 = vadd.f32 %v249, %v250
        %v252 = vmul.f32 %v244, %v226
        %v253 = vmul.f32 %v251, %v226
        %v254 = vadd.f32 %v252, 1e-06
        %v255 = vadd.f32 %v253, 1e-06
        %v256 = vrsqrt.pop %v254
        %v257 = vrsqrt.pop %v255
        %v260 = vcombine.low %v256, %v257
        %v262 = vmul.f32 %v233, %v260
        %v263 = vld [vmem:[%s1] sm:$0xf]
        %265 = vset.pattern.permute.xlu0 0
        %266 = vperm.xlu0 %265, %v263
        %v267 = vpop.permute.xlu0 %266
        %v269 = vunpack.c.l.s4 839922192
        %v270 = vunpack.c.0.s8 %v269
        %v271 = vlaneseq
        %v272 = vshrl.u32 %v271, 7
        %v273 = vsub.s32 %v270, %v272
        %v274 = vrot.slane %v267, %v273
        %v276 = vmul.f32 %v262, %v274
        %v277 = vld [vmem:[%s2] sm:$0xf]
        %279 = vset.pattern.permute.xlu0 0
        %280 = vperm.xlu0 %279, %v277
        %v281 = vpop.permute.xlu0 %280
        %v283 = vunpack.c.l.s4 839922192
        %v284 = vunpack.c.0.s8 %v283
        %v285 = vlaneseq
        %v286 = vshrl.u32 %v285, 7
        %v287 = vsub.s32 %v284, %v286
        %v288 = vrot.slane %v281, %v287
        %v290 = vadd.f32 %v276, %v288
        %291 = vst [vmem:[%s204] sm:$0xff] %v290
        %s292 = sand.u32 %s112, 1
        %s293 = scalar_lea.sflag [#allocation4], %s292
        %s294 = sand.u32 %s112, 1
        %s295 = smul.addr %s294, 8
        %s296 = scalar_lea.vmem [#allocation5], %s295
        // Predicated region
        $region37: #{tpu_custom_call.1} parent=31 // pred_check
          %p297 = pneg %p122
        $region38: #{tpu_custom_call.1} parent=31 // pred_check_branch
          %299 = sbr.rel (%p297) target = $region40
        $region39: #{tpu_custom_call.1} parent=31 // pred_region
          %s300 = smul.u32 2, %s25
          %s302 = ssub.s32 128, 128
          %303 = vsyncadd %s293, %s302
          %s304 = smul.addr %s24, 2
          %s305 = sadd.s32 %s300, %s304
          %s306 = smul.addr %s305, 64
          %s307 = scalar_lea.hbm %s3, %s306
          %s309 = sshll.u32 %s296, 4
          %s310 = int_to_ptr.vmem [resolvable:$true] %s309
          %312 = dma.vmem_to_hbm [thread:$0]  %s310, 128, %s307, %s293
        $region40: #{tpu_custom_call.1} parent=31 // pred_fallthru
          _
      $region32: #{tpu_custom_call.1} parent=5 // pred_fallthru
        _
      %p313 = scmp.le.s32.totalorder 2, %s15
      // Predicated region
      $region41: #{tpu_custom_call.1} parent=5 // pred_check
        %p314 = pneg %p313
      $region42: #{tpu_custom_call.1} parent=5 // pred_check_branch
        %316 = sbr.rel (%p314) target = $region44
      $region43: #{tpu_custom_call.1} parent=5 // pred_region
        %s317 = ssub.s32 %s15, 2
        // Predicated region
        $region45: #{tpu_custom_call.1} parent=43 // pred_check
          %p318 = pneg %p128
        $region46: #{tpu_custom_call.1} parent=43 // pred_check_branch
          %320 = sbr.rel (%p318) target = $region48
        $region47: #{tpu_custom_call.1} parent=43 // pred_region
          %s321 = sand.u32 %s113, 1
          %s322 = scalar_lea.sflag [#allocation4], %s321
          %s323 = sand.u32 %s113, 1
          %s324 = smul.addr %s323, 8
          %s325 = scalar_lea.vmem [#allocation5], %s324
          %326 = dma.done %s322, 128
        $region48: #{tpu_custom_call.1} parent=43 // pred_fallthru
          _
      $region44: #{tpu_custom_call.1} parent=5 // pred_fallthru
        _
    $region6: #{tpu_custom_call.1} parent=1 // loop_footer
      %s19 = sadd.s32 1, %s15
    $region7: #{tpu_custom_call.1} parent=1 // loop_footer_branch
      %14 = sbr.rel target = $region3
    $region8: #{tpu_custom_call.1} parent=1 // loop_exit
      _
    %327 = vsyncpa [#allocation3], 1
    %s328 = scalar_lea.sflag [#allocation3], 1
    %329 = vsyncpa %s328, 1
    %330 = vsyncpa [#allocation4], 1
    %s331 = scalar_lea.sflag [#allocation4], 1
    %332 = vsyncpa %s331, 1

</llo_original>
